<compile_context>
chip_gen: v6e
topology: v6e:2x2x1
jax: 0.10.0
libtpu: 0.0.40
codegen_flags: <defaults>
</compile_context>

<pallas_src>
import functools
import math

import jax
import jax.numpy as jnp
from jax.experimental import pallas as pl
from jax.experimental.pallas import tpu as pltpu


def _round_up(x: int, m: int) -> int:
    return (x + m - 1) // m * m


def _sublane_multiple(dtype) -> int:
    itemsize = jnp.dtype(dtype).itemsize
    if itemsize == 2:
        return 16
    if itemsize == 1:
        return 32
    return 8


def _vmem_budget_bytes() -> int:
    # Generation-aware VMEM budget: ~3/4 of physical capacity.
    try:
        info = pltpu.get_tpu_info()
        cap = int(getattr(info, "vmem_capacity_bytes", 0) or 0)
        if cap > 0:
            return (cap * 3) // 4
    except Exception:
        pass
    return 48 * 1024 * 1024  # v7x-safe fallback


def _resident_vmem_spec():
    # Whole array, non-pipelined, single resident VMEM copy (no double buffering).
    return pl.BlockSpec(memory_space=pltpu.MemorySpace.VMEM)


def _linear_skip_kernel(x_ref, wt_ref, b_ref, o_ref, *, n_split: bool):
    # x_ref: (TM, D)   wt_ref: (D, TN) [= W^T block]   b_ref: (1, TN)   o_ref: (TM, TN)
    x = x_ref[...]
    # Standard [TM,K]x[K,TN] contraction (W^T prepared in the wrapper).
    y = jnp.dot(x, wt_ref[...], preferred_element_type=jnp.float32)
    if n_split:
        tn = o_ref.shape[-1]
        start = pl.multiple_of(pl.program_id(1) * tn, 128)
        x_skip = x_ref[:, pl.ds(start, tn)]
    else:
        x_skip = x
    o_ref[...] = (
        y + b_ref[...].astype(jnp.float32) + x_skip.astype(jnp.float32)
    ).astype(o_ref.dtype)


def linear_skip_projector(x, weight, bias, *, tm_max=1024, tn_override=None):
    """x: [..., d_in], weight: [d_out, d_in], bias: [d_out]. Returns proj(x) + x."""
    d_in = x.shape[-1]
    d_out = weight.shape[0]
    assert d_in == d_out, "skip connection requires d_in == d_out"

    orig_shape = x.shape
    x2d = x.reshape(-1, d_in)  # (M, D)
    M = x2d.shape[0]

    x_item = jnp.dtype(x.dtype).itemsize
    w_item = jnp.dtype(weight.dtype).itemsize
    b_item = jnp.dtype(bias.dtype).itemsize

    # Lane-dense feature dim; only pad when d is not already a multiple of 128
    # (pad/slice are full HBM passes over the activation).
    Dc = _round_up(d_in, 128)
    col_pad = Dc - d_in

    # One-time wrapper-side transpose: kernel consumes W^T = [d_in, d_out].
    wt = weight.T
    b2 = bias.reshape(1, d_out)
    if col_pad:
        # Zero padding is exact: padded x columns hit zero-padded W^T rows; padded
        # output columns get 0 matmul + 0 bias (+ garbage skip) and are sliced off.
        x2d = jnp.pad(x2d, ((0, 0), (0, col_pad)))
        wt = jnp.pad(wt, ((0, col_pad), (0, col_pad)))
        b2 = jnp.pad(b2, ((0, 0), (0, col_pad)))

    w_bytes = Dc * Dc * w_item
    b_bytes = Dc * b_item

    budget = _vmem_budget_bytes()
    margin = 2 * 1024 * 1024
    sub = _sublane_multiple(x.dtype)

    # Path A: whole W^T resident (single copy).  Path B: N-split over output features.
    n_split = (tn_override is not None) or (w_bytes + b_bytes > (budget * 5) // 8)

    if not n_split:
        tn = Dc
        avail = max(budget - margin - w_bytes - b_bytes, 0)
        per_row = 4 * Dc * x_item                      # x + out tiles, double buffered
        tm_budget = max(sub, (avail // per_row) // sub * sub)
    else:
        if tn_override is not None:
            tn = int(tn_override)
            assert tn % 128 == 0 and Dc % tn == 0
        else:
            # Largest multiple of 128 dividing Dc with 2 weight buffers <= budget/3.
            cand = max(128, ((budget // 3) // (2 * Dc * w_item)) // 128 * 128)
            cand = min(cand, Dc)
            tn, t = 128, 128
            while t <= cand:
                if Dc % t == 0:
                    tn = t
                t += 128
        avail = max(budget - margin - 2 * Dc * tn * w_item - 2 * tn * b_item, 0)
        per_row = 2 * Dc * x_item + 2 * tn * x_item    # x tile + out tile, double buffered
        tm_budget = max(sub, (avail // per_row) // sub * sub)

    tm = min(tm_max, tm_budget, _round_up(M, sub))
    # MXU-aligned row tiles (256/128 multiples); dtype sublane multiple otherwise.
    if tm >= 256:
        tm = (tm // 256) * 256
    elif tm >= 128:
        tm = (tm // 128) * 128
    else:
        tm = max(sub, (tm // sub) * sub)

    grid_m = pl.cdiv(M, tm)  # rows are never padded; Pallas masks the partial last block
    kernel = functools.partial(_linear_skip_kernel, n_split=n_split)

    if not n_split:
        grid = (grid_m,)
        in_specs = [
            pl.BlockSpec((tm, Dc), lambda i: (i, 0)),  # x rows, streamed over M
            _resident_vmem_spec(),                     # W^T, single resident VMEM copy
            _resident_vmem_spec(),                     # bias
        ]
        out_specs = pl.BlockSpec((tm, Dc), lambda i: (i, 0))
        dim_sem = ("parallel",)
        vmem_need = w_bytes + b_bytes + 4 * tm * Dc * x_item + margin
    else:
        grid_n = Dc // tn
        grid = (grid_m, grid_n)
        in_specs = [
            pl.BlockSpec((tm, Dc), lambda i, j: (i, 0)),  # x rows, resident across j
            pl.BlockSpec((Dc, tn), lambda i, j: (0, j)),  # W^T column block
            pl.BlockSpec((1, tn), lambda i, j: (0, j)),   # bias block
        ]
        out_specs = pl.BlockSpec((tm, tn), lambda i, j: (i, j))
        dim_sem = ("parallel", "arbitrary")
        vmem_need = (2 * Dc * tn * w_item + 2 * tn * b_item
                     + 2 * tm * Dc * x_item + 2 * tm * tn * x_item + margin)

    vmem_limit = int(min(max(vmem_need, 16 * 1024 * 1024), max(budget, vmem_need)))

    out = pl.pallas_call(
        kernel,
        out_shape=jax.ShapeDtypeStruct((M, Dc), x.dtype),
        grid=grid,
        in_specs=in_specs,
        out_specs=out_specs,
        compiler_params=pltpu.CompilerParams(
            dimension_semantics=dim_sem,
            vmem_limit_bytes=vmem_limit,
        ),
        cost_estimate=pl.CostEstimate(
            flops=2 * M * Dc * Dc,
            transcendentals=0,
            bytes_accessed=2 * M * Dc * x_item + w_bytes + b_bytes,
        ),
    )(x2d, wt, b2)

    if col_pad:
        out = out[:, :d_out]
    return out.reshape(orig_shape[:-1] + (d_out,))


def init_params(key, d_in, d_out, dtype=jnp.float32):
    # Matches the PyTorch module: weight zero-initialized,
    # bias keeps nn.Linear's default U(-1/sqrt(d_in), 1/sqrt(d_in)) init.
    weight = jnp.zeros((d_out, d_in), dtype=dtype)
    bound = 1.0 / math.sqrt(d_in)
    bias = jax.random.uniform(key, (d_out,), dtype=dtype, minval=-bound, maxval=bound)
    return weight, bias


if __name__ == "__main__":
    key = jax.random.PRNGKey(0)
    k_x, k_b, k_w, k_x2, k_b2 = jax.random.split(key, 5)

    # 1) Module-faithful config: zero weight, default-init bias.
    batch, seq, d = 2, 8, 32
    x = jax.random.normal(k_x, (batch, seq, d), dtype=jnp.float32)
    weight, bias = init_params(k_b, d, d)
    y = jax.block_until_ready(linear_skip_projector(x, weight, bias))
    y_ref = x @ weight.T + bias + x
    assert y.shape == (batch, seq, d)
    assert jnp.allclose(y, y_ref, atol=1e-5, rtol=1e-5)

    # 2) Non-zero weight, lane-aligned d (no wrapper pad/slice path).
    d2 = 256
    x2 = jax.random.normal(k_x2, (batch, seq, d2), dtype=jnp.float32)
    w2 = 0.02 * jax.random.normal(k_w, (d2, d2), dtype=jnp.float32)
    bias2 = 0.1 * jax.random.normal(k_b2, (d2,), dtype=jnp.float32)
    y2 = jax.block_until_ready(linear_skip_projector(x2, w2, bias2))
    y2_ref = x2 @ w2.T + bias2 + x2
    assert jnp.allclose(y2, y2_ref, atol=1e-2, rtol=1e-2)

    # 3) Exercise the large-D N-split path at small scale via tn_override.
    y3 = jax.block_until_ready(linear_skip_projector(x2, w2, bias2, tn_override=128))
    assert jnp.allclose(y3, y2_ref, atol=1e-2, rtol=1e-2)

    print("KERNEL_OK")
</pallas_src>

<mosaic_0001>
module attributes {stable_mosaic.version = 11 : i64} {
  func.func @_linear_skip_kernel(%arg0: i32, %arg1: memref<16x128xf32, #tpu.memory_space<vmem>>, %arg2: memref<128x128xf32, #tpu.memory_space<vmem>>, %arg3: memref<1x128xf32, #tpu.memory_space<vmem>>, %arg4: memref<16x128xf32, #tpu.memory_space<vmem>>) attributes {dimension_semantics = [#tpu.dimension_semantics<parallel>], iteration_bounds = array<i64: 1>, scalar_prefetch = 0 : i64, scratch_operands = 0 : i64, tpu.core_type = #tpu.core_type<tc>, window_params = [{transform_indices = @transform_0, window_bounds = array<i64: 16, 128>}, {pipeline_mode = #tpu.pipeline_mode<synchronous>, transform_indices = @transform_1, window_bounds = array<i64: 128, 128>}, {pipeline_mode = #tpu.pipeline_mode<synchronous>, transform_indices = @transform_2, window_bounds = array<i64: 1, 128>}, {transform_indices = @transform_3, window_bounds = array<i64: 16, 128>}]} {
    %c0 = arith.constant 0 : index
    %c0_0 = arith.constant 0 : index
    %0 = vector.load %arg1[%c0, %c0_0] : memref<16x128xf32, #tpu.memory_space<vmem>>, vector<16x128xf32>
    %c0_1 = arith.constant 0 : index
    %c0_2 = arith.constant 0 : index
    %1 = vector.load %arg2[%c0_1, %c0_2] : memref<128x128xf32, #tpu.memory_space<vmem>>, vector<128x128xf32>
    %cst = arith.constant dense<0.000000e+00> : vector<16x128xf32>
    %2 = tpu.matmul %0, %1, %cst {dimension_numbers = #tpu.dot_dimension_numbers<[1], [0], [0], [1], [0, 0, 1, 1], [], []>} : vector<16x128xf32>, vector<128x128xf32>, vector<16x128xf32> -> vector<16x128xf32>
    %c0_3 = arith.constant 0 : index
    %c0_4 = arith.constant 0 : index
    %3 = vector.load %arg3[%c0_3, %c0_4] : memref<1x128xf32, #tpu.memory_space<vmem>>, vector<1x128xf32>
    %4 = vector.broadcast %3 : vector<1x128xf32> to vector<16x128xf32>
    %5 = arith.addf %2, %4 : vector<16x128xf32>
    %6 = arith.addf %5, %0 : vector<16x128xf32>
    %c0_5 = arith.constant 0 : index
    %c0_6 = arith.constant 0 : index
    %7 = vector.load %arg4[%c0_5, %c0_6] : memref<16x128xf32, #tpu.memory_space<vmem>>, vector<16x128xf32>
    tpu.vector_store %arg4[%c0_5, %c0_6], %6 {strides = array<i32>} : memref<16x128xf32, #tpu.memory_space<vmem>>, vector<16x128xf32>,
    return
  }
  func.func @transform_0(%arg0: i32) -> (i32, i32) {
    %c0_i32 = arith.constant 0 : i32
    %c0_i32_0 = arith.constant 0 : i32
    return %arg0, %c0_i32 : i32, i32
  }
  func.func @transform_1(%arg0: i32) -> (i32, i32) {
    %c0_i32 = arith.constant 0 : i32
    %c0_i32_0 = arith.constant 0 : i32
    %c0_i32_1 = arith.constant 0 : i32
    return %c0_i32, %c0_i32_0 : i32, i32
  }
  func.func @transform_2(%arg0: i32) -> (i32, i32) {
    %c0_i32 = arith.constant 0 : i32
    %c0_i32_0 = arith.constant 0 : i32
    %c0_i32_1 = arith.constant 0 : i32
    return %c0_i32, %c0_i32_0 : i32, i32
  }
  func.func @transform_3(%arg0: i32) -> (i32, i32) {
    %c0_i32 = arith.constant 0 : i32
    %c0_i32_0 = arith.constant 0 : i32
    return %arg0, %c0_i32 : i32, i32
  }
}

</mosaic_0001>

<llo_original>
// kernel: tpu_custom_call.1
$region0: #{tpu_custom_call.1}
  #allocation0 [shape = 'u32[]', space=smem, size = 0x4, offset = 0x4, fixed_abs, tag = 'smem constant byte address 0x4 - core index']
  #allocation1 [shape = 'u32[144,128]{1,0:T(1,128)}', space=vmem, size = 0x12000, scoped, tag = 'internal scratch']
  %s0 = inlined_call_operand.hbm [shape: f32[16,128], index: 0, kind: input, shape index: {}]
  %s1 = inlined_call_operand.hbm [shape: f32[128,128], index: 1, kind: input, shape index: {}]
  %s2 = inlined_call_operand.vmem [shape: f32[1,128], index: 2, kind: input, shape index: {}]
  %s3 = inlined_call_operand.hbm [shape: f32[16,128], index: 3, kind: output, shape index: {}]
  %s4 = sld [smem:[#allocation0]]
  $region30: #{tpu_custom_call.1} parent=0
    _
  %s6 = ssub.s32 1, %s4
  %s7 = scalar_select 0, %s6, %s4
  $region1: #{tpu_custom_call.1} parent=0
    #allocation2 [shape = 'u8[8192]{0}', space=vmem, size = 0x2000, scoped, tag = 'input window, operand 0, single buffered']
    #allocation3 [shape = 's32[1]{0}', space=sflag, size = 0x4, scoped, tag = 'scoped memory for tpu_custom_call.1']
    #allocation4 [shape = 's32[1]{0}', space=sflag, size = 0x4, scoped, tag = 'scoped memory for tpu_custom_call.1']
    #allocation5 [shape = 'u8[65536]{0}', space=vmem, size = 0x10000, scoped, tag = 'input window, operand 1, single buffered']
    #allocation6 [shape = 's32[1]{0}', space=sflag, size = 0x4, scoped, tag = 'scoped memory for tpu_custom_call.1']
    #allocation7 [shape = 'u8[8192]{0}', space=vmem, size = 0x2000, scoped, tag = 'output window, operand 0, single buffered']
    %8 = vsyncpa [#allocation3], 0
    %9 = vsyncpa [#allocation6], 0
    %10 = vsyncpa [#allocation4], 0
    // Predicated region
    $region2: #{tpu_custom_call.1} parent=1 // pred_check
      _
    $region3: #{tpu_custom_call.1} parent=1 // pred_check_branch
      %12 = sbr.rel (0) target = $region5
    $region4: #{tpu_custom_call.1} parent=1 // pred_region
      %s14 = ssub.s32 256, 256
      %15 = vsyncadd [#allocation3], %s14
      %s16 = sshll.u32 [#allocation2], 4
      %s17 = int_to_ptr.vmem [resolvable:$true] %s16
      %22 = dma.hbm_to_vmem [thread:$0]  %s0, 256, %s17, [#allocation3], 128, 128, 8
    $region5: #{tpu_custom_call.1} parent=1 // pred_fallthru
      _
    // Predicated region
    $region6: #{tpu_custom_call.1} parent=1 // pred_check
      _
    $region7: #{tpu_custom_call.1} parent=1 // pred_check_branch
      %24 = sbr.rel (0) target = $region9
    $region8: #{tpu_custom_call.1} parent=1 // pred_region
      %s26 = ssub.s32 2048, 2048
      %27 = vsyncadd [#allocation6], %s26
      %s28 = sshll.u32 [#allocation5], 4
      %s29 = int_to_ptr.vmem [resolvable:$true] %s28
      %34 = dma.hbm_to_vmem [thread:$0]  %s1, 2048, %s29, [#allocation6], 128, 128, 8
    $region9: #{tpu_custom_call.1} parent=1 // pred_fallthru
      _
    // Predicated region
    $region10: #{tpu_custom_call.1} parent=1 // pred_check
      _
    $region11: #{tpu_custom_call.1} parent=1 // pred_check_branch
      %36 = sbr.rel (0) target = $region13
    $region12: #{tpu_custom_call.1} parent=1 // pred_region
      _
    $region13: #{tpu_custom_call.1} parent=1 // pred_fallthru
      _
    // Predicated region
    $region14: #{tpu_custom_call.1} parent=1 // pred_check
      _
    $region15: #{tpu_custom_call.1} parent=1 // pred_check_branch
      %38 = sbr.rel (0) target = $region17
    $region16: #{tpu_custom_call.1} parent=1 // pred_region
      %39 = dma.done [#allocation3], 256
    $region17: #{tpu_custom_call.1} parent=1 // pred_fallthru
      _
    // Predicated region
    $region18: #{tpu_custom_call.1} parent=1 // pred_check
      _
    $region19: #{tpu_custom_call.1} parent=1 // pred_check_branch
      %41 = sbr.rel (0) target = $region21
    $region20: #{tpu_custom_call.1} parent=1 // pred_region
      %42 = dma.done [#allocation6], 2048
    $region21: #{tpu_custom_call.1} parent=1 // pred_fallthru
      _
    %v43 = vld [vmem:[#allocation2] sm:$0xff]
    %v44 = vld [vmem:[#allocation2 + $0x8] sm:$0xff]
    %v45 = vld [vmem:[#allocation5] sm:$0xff]
    %v46 = vld [vmem:[#allocation5 + $0x8] sm:$0xff]
    %v47 = vld [vmem:[#allocation5 + $0x10] sm:$0xff]
    %v48 = vld [vmem:[#allocation5 + $0x18] sm:$0xff]
    %v49 = vld [vmem:[#allocation5 + $0x20] sm:$0xff]
    %v50 = vld [vmem:[#allocation5 + $0x28] sm:$0xff]
    %v51 = vld [vmem:[#allocation5 + $0x30] sm:$0xff]
    %v52 = vld [vmem:[#allocation5 + $0x38] sm:$0xff]
    %v53 = vld [vmem:[#allocation5 + $0x40] sm:$0xff]
    %v54 = vld [vmem:[#allocation5 + $0x48] sm:$0xff]
    %v55 = vld [vmem:[#allocation5 + $0x50] sm:$0xff]
    %v56 = vld [vmem:[#allocation5 + $0x58] sm:$0xff]
    %v57 = vld [vmem:[#allocation5 + $0x60] sm:$0xff]
    %v58 = vld [vmem:[#allocation5 + $0x68] sm:$0xff]
    %v59 = vld [vmem:[#allocation5 + $0x70] sm:$0xff]
    %v60 = vld [vmem:[#allocation5 + $0x78] sm:$0xff]
    %v61 = vld [vmem:[%s2] sm:$0x1]
    %v63 = vlaneseq
    %v64 = vshrl.u32 %v63, 7
    %v65 = vsub.s32 0, %v64
    %v66 = vrot.slane %v61, %v65
    %68 = vmatprep.subr.mxu0 0.0
    %69 = vmatpush1.msra.mxu0 %v60
    %70 = vmatprep.subr.mxu0 0.0
    %71 = vmatpush1.msra.mxu0 %v59
    %72 = vmatprep.subr.mxu0 0.0
    %73 = vmatpush1.msra.mxu0 %v58
    %74 = vmatprep.subr.mxu0 0.0
    %75 = vmatpush1.msra.mxu0 %v57
    %76 = vmatprep.subr.mxu0 0.0
    %77 = vmatpush1.msra.mxu0 %v56
    %78 = vmatprep.subr.mxu0 0.0
    %79 = vmatpush1.msra.mxu0 %v55
    %80 = vmatprep.subr.mxu0 0.0
    %81 = vmatpush1.msra.mxu0 %v54
    %82 = vmatprep.subr.mxu0 0.0
    %83 = vmatpush1.msra.mxu0 %v53
    %84 = vmatprep.subr.mxu0 0.0
    %85 = vmatpush1.msra.mxu0 %v52
    %86 = vmatprep.subr.mxu0 0.0
    %87 = vmatpush1.msra.mxu0 %v51
    %88 = vmatprep.subr.mxu0 0.0
    %89 = vmatpush1.msra.mxu0 %v50
    %90 = vmatprep.subr.mxu0 0.0
    %91 = vmatpush1.msra.mxu0 %v49
    %92 = vmatprep.subr.mxu0 0.0
    %93 = vmatpush1.msra.mxu0 %v48
    %94 = vmatprep.subr.mxu0 0.0
    %95 = vmatpush1.msra.mxu0 %v47
    %96 = vmatprep.subr.mxu0 0.0
    %97 = vmatpush1.msra.mxu0 %v46
    %98 = vmatprep.subr.mxu0 0.0
    %99 = vmatpush1.msra.mxu0 %v45
    %100 = vmatprep.subr.mxu0 0.0
    %101 = vmatpush2.msra.mxu0 0.0
    %102 = vmatprep.subr.mxu0 0.0
    %103 = vmatpush2.msra.mxu0 0.0
    %104 = vmatprep.subr.mxu0 0.0
    %105 = vmatpush2.msra.mxu0 0.0
    %106 = vmatprep.subr.mxu0 0.0
    %107 = vmatpush2.msra.mxu0 0.0
    %108 = vmatprep.subr.mxu0 0.0
    %109 = vmatpush2.msra.mxu0 0.0
    %110 = vmatprep.subr.mxu0 0.0
    %111 = vmatpush2.msra.mxu0 0.0
    %112 = vmatprep.subr.mxu0 0.0
    %113 = vmatpush2.msra.mxu0 0.0
    %114 = vmatprep.subr.mxu0 0.0
    %115 = vmatpush2.msra.mxu0 0.0
    %116 = vmatprep.subr.mxu0 0.0
    %117 = vmatpush2.msra.mxu0 0.0
    %118 = vmatprep.subr.mxu0 0.0
    %119 = vmatpush2.msra.mxu0 0.0
    %120 = vmatprep.subr.mxu0 0.0
    %121 = vmatpush2.msra.mxu0 0.0
    %122 = vmatprep.subr.mxu0 0.0
    %123 = vmatpush2.msra.mxu0 0.0
    %124 = vmatprep.subr.mxu0 0.0
    %125 = vmatpush2.msra.mxu0 0.0
    %126 = vmatprep.subr.mxu0 0.0
    %127 = vmatpush2.msra.mxu0 0.0
    %128 = vmatprep.subr.mxu0 0.0
    %129 = vmatpush2.msra.mxu0 0.0
    %130 = vmatprep.subr.mxu0 0.0
    %131 = vmatpush2.msra.mxu0 0.0
    %132 = vmatprep.mubr.f32.mxu0 0.0
    %133 = vmatmul.mubr.f32.gmra.mxu0 %v43
    %v134 = vpop.f32.mrf.mxu0
    %v135 = vadd.f32 %v66, %v134
    %v136 = vpop.f32.mrf.mxu0
    %137 = vmatprep.mubr.f32.mxu0 0.0
    %138 = vmatmul.mubr.f32.gmra.mxu0 %v44
    %v139 = vpop.f32.mrf.mxu0
    %v140 = vadd.f32 %v66, %v139
    %v141 = vpop.f32.mrf.mxu0
    %142 = vdwg.mxu0
    %v143 = vadd.f32 %v135, %v43
    %v144 = vadd.f32 %v140, %v44
    %145 = vst [vmem:[#allocation7] sm:$0xff] %v143
    %146 = vst [vmem:[#allocation7 + $0x8] sm:$0xff] %v144
    // Predicated region
    $region22: #{tpu_custom_call.1} parent=1 // pred_check
      _
    $region23: #{tpu_custom_call.1} parent=1 // pred_check_branch
      %148 = sbr.rel (0) target = $region25
    $region24: #{tpu_custom_call.1} parent=1 // pred_region
      %s150 = ssub.s32 256, 256
      %151 = vsyncadd [#allocation4], %s150
      %s152 = sshll.u32 [#allocation7], 4
      %s153 = int_to_ptr.vmem [resolvable:$true] %s152
      %158 = dma.vmem_to_hbm [thread:$0]  %s153, 256, %s3, [#allocation4], 128, 128, 8
    $region25: #{tpu_custom_call.1} parent=1 // pred_fallthru
      _
    // Predicated region
    $region26: #{tpu_custom_call.1} parent=1 // pred_check
      _
    $region27: #{tpu_custom_call.1} parent=1 // pred_check_branch
      %160 = sbr.rel (0) target = $region29
    $region28: #{tpu_custom_call.1} parent=1 // pred_region
      %161 = dma.done [#allocation4], 256
    $region29: #{tpu_custom_call.1} parent=1 // pred_fallthru
      _
    %162 = vsyncpa [#allocation3], 1
    %163 = vsyncpa [#allocation6], 1
    %164 = vsyncpa [#allocation4], 1

</llo_original>
